<compile_context>
chip_gen: v6e
topology: v6e:2x2x1
jax: 0.10.0
libtpu: 0.0.40
codegen_flags: <defaults>
</compile_context>

<pallas_src>
import functools

import jax
import jax.numpy as jnp
from jax.experimental import pallas as pl
from jax.experimental.pallas import tpu as pltpu

# ---------------------------------------------------------------------------
# Small shapes consistent with the surrounding DETR-VQVAE usage
# ---------------------------------------------------------------------------
BATCH = 2
SEQ = 8
NUM_EMBEDDINGS = 16      # codebook size E
EMBEDDING_DIM = 32       # latent dim D
COMMITMENT_COST = 0.25

MAX_TM = 512             # rows per tile at scale (multiple of 128 -> lane-dense idx row)


def _round_up(x, m):
    return (x + m - 1) // m * m


# ---------------------------------------------------------------------------
# Fused VQ tile kernel: one (TM, D) block of inputs vs. the resident codebook
# ---------------------------------------------------------------------------
def _vq_tile_kernel(x_ref, e_ref, esq_ref, q_ref, idx_ref, sse_ref, *,
                    num_embeddings, num_valid_rows):
    x = x_ref[...]                       # (TM, D) f32 input rows
    e = e_ref[...]                       # (E, D)  f32 codebook (resident)
    esq = esq_ref[...]                   # (E, 1)  f32 ||e||^2 (precomputed in wrapper)
    tm = x.shape[0]

    # Transposed distances: dT[e, m] = ||e_e||^2 - 2 * x_m . e_e
    # (per-row ||x||^2 is constant along the argmin axis and therefore dropped).
    # Rows = codewords (sublanes), cols = input rows (lanes) -> argmin is lane-dense.
    xeT = jax.lax.dot_general(e, x, (((1,), (1,)), ((), ())),
                              preferred_element_type=jnp.float32)     # (E, TM)
    dT = esq - 2.0 * xeT                                              # (E, TM)

    row = jax.lax.broadcasted_iota(jnp.int32, dT.shape, 0)            # codeword ids
    min_d = jnp.min(dT, axis=0, keepdims=True)                        # (1, TM)
    # argmin with first-index tie-break (matches torch.argmin); reduce in f32
    # (row ids < 2^24 are exact), then cast.
    idx = jnp.min(jnp.where(dT <= min_d, row.astype(jnp.float32),
                            float(num_embeddings)),
                  axis=0, keepdims=True).astype(jnp.int32)            # (1, TM)

    # encodings.scatter_(1, idx, 1) ; quantized = encodings @ embedding.weight
    # (transposed one-hot, contraction over E on dim 0 of both operands).
    onehot_t = (row == idx).astype(jnp.float32)                       # (E, TM)
    quant = jax.lax.dot_general(onehot_t, e, (((0,), (0,)), ((), ())),
                                preferred_element_type=jnp.float32)   # (TM, D)

    q_ref[...] = quant
    idx_ref[...] = idx                                                # lane-dense store

    # Partial sum of squared error for this tile; rows past the true M (zero
    # padding) are masked out.  Final mean + (1+beta) scaling happens in the wrapper.
    g_row = (pl.program_id(0) * tm
             + jax.lax.broadcasted_iota(jnp.int32, (tm, 1), 0))
    diff = jnp.where(g_row < num_valid_rows, quant - x, 0.0)
    sse_ref[0, 0] = jnp.sum(diff * diff)


def pallas_vector_quantize(inputs, codebook, commitment_cost):
    """Forward pass of VectorQuantizer.

    inputs:   (..., D)  -> flattened to (M, D), like inputs.view(-1, D)
    codebook: (E, D)    -> embedding.weight
    returns:  quantized (M, D), loss (), encoding_indices (M, 1) int32
    """
    codebook = codebook.astype(jnp.float32)
    E, D = codebook.shape
    x = inputs.reshape(-1, D).astype(jnp.float32)
    M = x.shape[0]

    # Row-tile size: big tiles at scale, single full-array tile at small sizes.
    tm = min(MAX_TM, _round_up(M, 8))
    m_pad = _round_up(M, tm)
    num_tiles = m_pad // tm
    if m_pad != M:
        x = jnp.pad(x, ((0, m_pad - M), (0, 0)))

    # Codebook squared norms, computed once per call in the wrapper (parameter-derived).
    e_sq = jnp.sum(codebook * codebook, axis=1, keepdims=True)        # (E, 1)

    kernel = functools.partial(_vq_tile_kernel, num_embeddings=E, num_valid_rows=M)

    quant, idx, sse = pl.pallas_call(
        kernel,
        out_shape=(jax.ShapeDtypeStruct((m_pad, D), jnp.float32),
                   jax.ShapeDtypeStruct((num_tiles, tm), jnp.int32),
                   jax.ShapeDtypeStruct((num_tiles, 1), jnp.float32)),
        grid_spec=pltpu.PrefetchScalarGridSpec(
            num_scalar_prefetch=0,
            grid=(num_tiles,),
            in_specs=[
                pl.BlockSpec((tm, D), lambda i: (i, 0)),              # x tile (pipelined)
                pl.BlockSpec((E, D), lambda i: (0, 0)),               # codebook (resident)
                pl.BlockSpec((E, 1), lambda i: (0, 0)),               # ||e||^2 (resident)
            ],
            out_specs=(
                pl.BlockSpec((tm, D), lambda i: (i, 0)),              # quantized rows
                pl.BlockSpec((1, tm), lambda i: (i, 0)),              # lane-dense indices
                pl.BlockSpec((1, 1), lambda i: (i, 0),
                             memory_space=pltpu.MemorySpace.SMEM),    # per-tile SSE
            ),
        ),
        compiler_params=pltpu.CompilerParams(
            dimension_semantics=("parallel",)),                       # v7x: 2 TCs/chip
    )(x, codebook, e_sq)

    quantized = quant[:M]
    encoding_indices = idx.reshape(-1)[:M][:, None]
    # e_latent_loss == q_latent_loss numerically in the forward pass.
    loss = (1.0 + commitment_cost) * jnp.sum(sse) / (M * D)

    # Straight-through: inputs + (quantized - inputs).detach() -> value == quantized.
    return quantized, loss, encoding_indices


# ---------------------------------------------------------------------------
# Pure-JAX reference (mirrors the PyTorch forward) for a correctness check
# ---------------------------------------------------------------------------
def vq_reference(inputs, codebook, commitment_cost):
    D = codebook.shape[1]
    x = inputs.reshape(-1, D).astype(jnp.float32)
    dist = (jnp.sum(x * x, axis=1, keepdims=True)
            + jnp.sum(codebook * codebook, axis=1)
            - 2.0 * x @ codebook.T)
    idx = jnp.argmin(dist, axis=1)
    quant = codebook[idx]
    e_latent = jnp.mean((quant - x) ** 2)
    q_latent = jnp.mean((quant - x) ** 2)
    loss = q_latent + commitment_cost * e_latent
    return quant, loss, idx[:, None].astype(jnp.int32)


# ---------------------------------------------------------------------------
if __name__ == "__main__":
    key = jax.random.PRNGKey(0)
    k_emb, k_in = jax.random.split(key)

    # embedding.weight.data.uniform_(-1/num_embeddings, 1/num_embeddings)
    codebook = jax.random.uniform(
        k_emb, (NUM_EMBEDDINGS, EMBEDDING_DIM), jnp.float32,
        -1.0 / NUM_EMBEDDINGS, 1.0 / NUM_EMBEDDINGS)

    # inputs: any (..., embedding_dim); here (batch, seq, D) as the CVAE latent path uses
    inputs = jax.random.normal(k_in, (BATCH, SEQ, EMBEDDING_DIM), jnp.float32)

    quantized, loss, encoding_indices = pallas_vector_quantize(
        inputs, codebook, COMMITMENT_COST)
    jax.block_until_ready((quantized, loss, encoding_indices))

    # Shape contract (matches PyTorch: inputs flattened to (M, D))
    M = BATCH * SEQ
    assert quantized.shape == (M, EMBEDDING_DIM)
    assert loss.shape == ()
    assert encoding_indices.shape == (M, 1)

    # Numerical check against the pure-JAX reference
    q_ref, l_ref, i_ref = vq_reference(inputs, codebook, COMMITMENT_COST)
    assert jnp.array_equal(encoding_indices, i_ref)
    assert jnp.allclose(quantized, q_ref, atol=1e-5, rtol=1e-5)
    assert jnp.allclose(loss, l_ref, atol=1e-5, rtol=1e-5)

    print("KERNEL_OK")
</pallas_src>

<mosaic_0001>
module attributes {stable_mosaic.version = 11 : i64} {
  func.func @_vq_tile_kernel(%arg0: i32, %arg1: memref<16x32xf32, #tpu.memory_space<vmem>>, %arg2: memref<16x32xf32, #tpu.memory_space<vmem>>, %arg3: memref<16x1xf32, #tpu.memory_space<vmem>>, %arg4: memref<16x32xf32, #tpu.memory_space<vmem>>, %arg5: memref<1x16xi32, #tpu.memory_space<vmem>>, %arg6: memref<1x1xf32, #tpu.memory_space<smem>>) attributes {dimension_semantics = [#tpu.dimension_semantics<parallel>], iteration_bounds = array<i64: 1>, scalar_prefetch = 0 : i64, scratch_operands = 0 : i64, tpu.core_type = #tpu.core_type<tc>, window_params = [{transform_indices = @transform_0, window_bounds = array<i64: 16, 32>}, {pipeline_mode = #tpu.pipeline_mode<synchronous>, transform_indices = @transform_1, window_bounds = array<i64: 16, 32>}, {pipeline_mode = #tpu.pipeline_mode<synchronous>, transform_indices = @transform_2, window_bounds = array<i64: 16, 1>}, {transform_indices = @transform_3, window_bounds = array<i64: 16, 32>}, {transform_indices = @transform_4, window_bounds = array<i64: 1, 16>}, {transform_indices = @transform_5, window_bounds = array<i64: 1, 1>}]} {
    %c0 = arith.constant 0 : index
    %c0_0 = arith.constant 0 : index
    %0 = vector.load %arg1[%c0, %c0_0] : memref<16x32xf32, #tpu.memory_space<vmem>>, vector<16x32xf32>
    %c0_1 = arith.constant 0 : index
    %c0_2 = arith.constant 0 : index
    %1 = vector.load %arg2[%c0_1, %c0_2] : memref<16x32xf32, #tpu.memory_space<vmem>>, vector<16x32xf32>
    %c0_3 = arith.constant 0 : index
    %c0_4 = arith.constant 0 : index
    %2 = vector.load %arg3[%c0_3, %c0_4] : memref<16x1xf32, #tpu.memory_space<vmem>>, vector<16x1xf32>
    %cst = arith.constant dense<0.000000e+00> : vector<16x16xf32>
    %3 = tpu.matmul %1, %0, %cst {dimension_numbers = #tpu.dot_dimension_numbers<[1], [1], [0], [0], [0, 0, 1, 0], [], []>} : vector<16x32xf32>, vector<16x32xf32>, vector<16x16xf32> -> vector<16x16xf32>
    %cst_5 = arith.constant 2.000000e+00 : f32
    %4 = vector.broadcast %cst_5 : f32 to vector<16x16xf32>
    %5 = arith.mulf %4, %3 : vector<16x16xf32>
    %6 = vector.broadcast %2 : vector<16x1xf32> to vector<16x16xf32>
    %7 = arith.subf %6, %5 : vector<16x16xf32>
    %8 = tpu.iota {dimensions = array<i32: 0>} : vector<16x16xi32>
    %cst_6 = arith.constant dense<0x7F800000> : vector<16xf32>
    %9 = vector.multi_reduction <minimumf>, %7, %cst_6 [0] : vector<16x16xf32> to vector<16xf32>
    %10 = vector.shape_cast %9 : vector<16xf32> to vector<1x16xf32>
    %11 = vector.broadcast %10 : vector<1x16xf32> to vector<16x16xf32>
    %12 = arith.cmpf ole, %7, %11 : vector<16x16xf32>
    %13 = arith.sitofp %8 : vector<16x16xi32> to vector<16x16xf32>
    %cst_7 = arith.constant 1.600000e+01 : f32
    %14 = vector.broadcast %cst_7 : f32 to vector<16x16xf32>
    %15 = arith.select %12, %13, %14 : vector<16x16xi1>, vector<16x16xf32>
    %cst_8 = arith.constant dense<0x7F800000> : vector<16xf32>
    %16 = vector.multi_reduction <minimumf>, %15, %cst_8 [0] : vector<16x16xf32> to vector<16xf32>
    %17 = vector.shape_cast %16 : vector<16xf32> to vector<1x16xf32>
    %18 = arith.fptosi %17 : vector<1x16xf32> to vector<1x16xi32>
    %19 = vector.broadcast %18 : vector<1x16xi32> to vector<16x16xi32>
    %20 = arith.cmpi eq, %8, %19 : vector<16x16xi32>
    %21 = arith.extui %20 : vector<16x16xi1> to vector<16x16xi32>
    %22 = arith.sitofp %21 : vector<16x16xi32> to vector<16x16xf32>
    %cst_9 = arith.constant dense<0.000000e+00> : vector<16x32xf32>
    %23 = tpu.matmul %22, %1, %cst_9 {dimension_numbers = #tpu.dot_dimension_numbers<[0], [0], [1], [1], [0, 1, 1, 1], [], []>} : vector<16x16xf32>, vector<16x32xf32>, vector<16x32xf32> -> vector<16x32xf32>
    %c0_10 = arith.constant 0 : index
    %c0_11 = arith.constant 0 : index
    %24 = vector.load %arg4[%c0_10, %c0_11] : memref<16x32xf32, #tpu.memory_space<vmem>>, vector<16x32xf32>
    tpu.vector_store %arg4[%c0_10, %c0_11], %23 {strides = array<i32>} : memref<16x32xf32, #tpu.memory_space<vmem>>, vector<16x32xf32>,
    %c0_12 = arith.constant 0 : index
    %c0_13 = arith.constant 0 : index
    %25 = vector.load %arg5[%c0_12, %c0_13] : memref<1x16xi32, #tpu.memory_space<vmem>>, vector<1x16xi32>
    tpu.vector_store %arg5[%c0_12, %c0_13], %18 {strides = array<i32>} : memref<1x16xi32, #tpu.memory_space<vmem>>, vector<1x16xi32>,
    %c16_i32 = arith.constant 16 : i32
    %26 = arith.muli %arg0, %c16_i32 : i32
    %27 = tpu.iota {dimensions = array<i32: 0>} : vector<16x1xi32>
    %28 = vector.broadcast %26 : i32 to vector<16x1xi32>
    %29 = arith.addi %28, %27 : vector<16x1xi32>
    %c16_i32_14 = arith.constant 16 : i32
    %30 = vector.broadcast %c16_i32_14 : i32 to vector<16x1xi32>
    %31 = arith.cmpi slt, %29, %30 : vector<16x1xi32>
    %32 = arith.subf %23, %0 : vector<16x32xf32>
    %cst_15 = arith.constant 0.000000e+00 : f32
    %33 = vector.shape_cast %31 : vector<16x1xi1> to vector<16x1xi1>
    %34 = vector.broadcast %33 : vector<16x1xi1> to vector<16x32xi1>
    %35 = vector.broadcast %cst_15 : f32 to vector<16x32xf32>
    %36 = arith.select %34, %32, %35 : vector<16x32xi1>, vector<16x32xf32>
    %37 = arith.mulf %36, %36 : vector<16x32xf32>
    %38 = vector.shape_cast %37 : vector<16x32xf32> to vector<1x16x32xf32>
    %cst_16 = arith.constant dense<0.000000e+00> : vector<1xf32>
    %39 = vector.multi_reduction <add>, %38, %cst_16 [1, 2] : vector<1x16x32xf32> to vector<1xf32>
    %40 = vector.shape_cast %39 : vector<1xf32> to vector<1x1x1xf32>
    %41 = vector.extract %40[0, 0, 0] : f32 from vector<1x1x1xf32>
    %c0_17 = arith.constant 0 : index
    %c0_18 = arith.constant 0 : index
    %42 = memref.load %arg6[%c0_17, %c0_18] : memref<1x1xf32, #tpu.memory_space<smem>>
    memref.store %41, %arg6[%c0_17, %c0_18] : memref<1x1xf32, #tpu.memory_space<smem>>
    return
  }
  func.func @transform_0(%arg0: i32) -> (i32, i32) {
    %c0_i32 = arith.constant 0 : i32
    %c0_i32_0 = arith.constant 0 : i32
    return %arg0, %c0_i32 : i32, i32
  }
  func.func @transform_1(%arg0: i32) -> (i32, i32) {
    %c0_i32 = arith.constant 0 : i32
    %c0_i32_0 = arith.constant 0 : i32
    %c0_i32_1 = arith.constant 0 : i32
    return %c0_i32, %c0_i32_0 : i32, i32
  }
  func.func @transform_2(%arg0: i32) -> (i32, i32) {
    %c0_i32 = arith.constant 0 : i32
    %c0_i32_0 = arith.constant 0 : i32
    %c0_i32_1 = arith.constant 0 : i32
    return %c0_i32, %c0_i32_0 : i32, i32
  }
  func.func @transform_3(%arg0: i32) -> (i32, i32) {
    %c0_i32 = arith.constant 0 : i32
    %c0_i32_0 = arith.constant 0 : i32
    return %arg0, %c0_i32 : i32, i32
  }
  func.func @transform_4(%arg0: i32) -> (i32, i32) {
    %c0_i32 = arith.constant 0 : i32
    %c0_i32_0 = arith.constant 0 : i32
    return %arg0, %c0_i32 : i32, i32
  }
  func.func @transform_5(%arg0: i32) -> (i32, i32) {
    %c0_i32 = arith.constant 0 : i32
    %c0_i32_0 = arith.constant 0 : i32
    return %arg0, %c0_i32 : i32, i32
  }
}

</mosaic_0001>

<llo_original>
// kernel: tpu_custom_call.1
$region0: #{tpu_custom_call.1}
  #allocation0 [shape = 'u32[]', space=smem, size = 0x4, offset = 0x4, fixed_abs, tag = 'smem constant byte address 0x4 - core index']
  #allocation1 [shape = 'u32[144,128]{1,0:T(1,128)}', space=vmem, size = 0x12000, scoped, tag = 'internal scratch']
  %s0 = inlined_call_operand.vmem [shape: f32[16,32], index: 0, kind: input, shape index: {}]
  %s1 = inlined_call_operand.hbm [shape: f32[16,32], index: 1, kind: input, shape index: {}]
  %s2 = inlined_call_operand.vmem [shape: f32[16,1], index: 2, kind: input, shape index: {}]
  %s3 = inlined_call_operand.hbm [shape: f32[16,32], index: 3, kind: output, shape index: {0}]
  %s4 = inlined_call_operand.hbm [shape: s32[1,16], index: 4, kind: output, shape index: {1}]
  %s5 = inlined_call_operand.hbm [shape: f32[1,1], index: 5, kind: output, shape index: {2}]
  %6 = xla_tuple %s3, %s4, %s5
  %s7 = sld [smem:[#allocation0]]
  $region42: #{tpu_custom_call.1} parent=0
    _
  %s9 = ssub.s32 1, %s7
  %s10 = scalar_select 0, %s9, %s7
  $region1: #{tpu_custom_call.1} parent=0
    #allocation2 [shape = 'u8[8192]{0}', space=vmem, size = 0x2000, scoped, tag = 'input window, operand 1, single buffered']
    #allocation3 [shape = 's32[1]{0}', space=sflag, size = 0x4, scoped, tag = 'scoped memory for tpu_custom_call.1']
    #allocation4 [shape = 's32[1]{0}', space=sflag, size = 0x4, scoped, tag = 'scoped memory for tpu_custom_call.1']
    #allocation5 [shape = 's32[1]{0}', space=sflag, size = 0x4, scoped, tag = 'scoped memory for tpu_custom_call.1']
    #allocation6 [shape = 'u8[8192]{0}', space=vmem, size = 0x2000, scoped, tag = 'output window, operand 0, single buffered']
    #allocation7 [shape = 'u8[512]{0}', space=vmem, size = 0x400, scoped, tag = 'output window, operand 1, single buffered']
    #allocation8 [shape = 's32[1]{0}', space=sflag, size = 0x4, scoped, tag = 'scoped memory for tpu_custom_call.1']
    #allocation9 [shape = 'u8[512]{0}', space=smem, size = 0x200, scoped, tag = 'output window, operand 2, single buffered']
    %11 = vsyncpa [#allocation3], 0
    %12 = vsyncpa [#allocation4], 0
    %13 = vsyncpa [#allocation8], 0
    %14 = vsyncpa [#allocation5], 0
    // Predicated region
    $region2: #{tpu_custom_call.1} parent=1 // pred_check
      _
    $region3: #{tpu_custom_call.1} parent=1 // pred_check_branch
      %16 = sbr.rel (0) target = $region5
    $region4: #{tpu_custom_call.1} parent=1 // pred_region
      _
    $region5: #{tpu_custom_call.1} parent=1 // pred_fallthru
      _
    // Predicated region
    $region6: #{tpu_custom_call.1} parent=1 // pred_check
      _
    $region7: #{tpu_custom_call.1} parent=1 // pred_check_branch
      %18 = sbr.rel (0) target = $region9
    $region8: #{tpu_custom_call.1} parent=1 // pred_region
      %s20 = ssub.s32 256, 256
      %21 = vsyncadd [#allocation3], %s20
      %s22 = sshll.u32 [#allocation2], 4
      %s23 = int_to_ptr.vmem [resolvable:$true] %s22
      %28 = dma.hbm_to_vmem [thread:$0]  %s1, 256, %s23, [#allocation3], 128, 128, 8
    $region9: #{tpu_custom_call.1} parent=1 // pred_fallthru
      _
    // Predicated region
    $region10: #{tpu_custom_call.1} parent=1 // pred_check
      _
    $region11: #{tpu_custom_call.1} parent=1 // pred_check_branch
      %30 = sbr.rel (0) target = $region13
    $region12: #{tpu_custom_call.1} parent=1 // pred_region
      _
    $region13: #{tpu_custom_call.1} parent=1 // pred_fallthru
      _
    // Predicated region
    $region14: #{tpu_custom_call.1} parent=1 // pred_check
      _
    $region15: #{tpu_custom_call.1} parent=1 // pred_check_branch
      %32 = sbr.rel (0) target = $region17
    $region16: #{tpu_custom_call.1} parent=1 // pred_region
      %33 = dma.done [#allocation3], 256
    $region17: #{tpu_custom_call.1} parent=1 // pred_fallthru
      _
    %v34 = vld [vmem:[%s0] sm:$0xff]
    %v35 = vld [vmem:[%s0 + $0x8] sm:$0xff]
    %v36 = vld [vmem:[#allocation2] sm:$0xff]
    %v37 = vld [vmem:[#allocation2 + $0x8] sm:$0xff]
    %v38 = vld [vmem:[%s2] sm:$0xff]
    %v39 = vld [vmem:[%s2 + $0x8] sm:$0xff]
    %vm40 = vcmask 261120
    %v42 = vsel %vm40, %v36, 0
    %v45 = vsel %vm40, %v37, 0
    %v48 = vsel %vm40, %v34, 0
    %v51 = vsel %vm40, %v35, 0
    %53 = vmatprep.subr.mxu0 0.0
    %54 = vmatpush1.xpose.msra.mxu0 0.0
    %55 = vmatprep.subr.mxu0 0.0
    %56 = vmatpush1.xpose.msra.mxu0 0.0
    %57 = vmatprep.subr.mxu0 0.0
    %58 = vmatpush1.xpose.msra.mxu0 0.0
    %59 = vmatprep.subr.mxu0 0.0
    %60 = vmatpush1.xpose.msra.mxu0 0.0
    %61 = vmatprep.subr.mxu0 0.0
    %62 = vmatpush1.xpose.msra.mxu0 0.0
    %63 = vmatprep.subr.mxu0 0.0
    %64 = vmatpush1.xpose.msra.mxu0 0.0
    %65 = vmatprep.subr.mxu0 0.0
    %66 = vmatpush1.xpose.msra.mxu0 0.0
    %67 = vmatprep.subr.mxu0 0.0
    %68 = vmatpush1.xpose.msra.mxu0 0.0
    %69 = vmatprep.subr.mxu0 0.0
    %70 = vmatpush1.xpose.msra.mxu0 0.0
    %71 = vmatprep.subr.mxu0 0.0
    %72 = vmatpush1.xpose.msra.mxu0 0.0
    %73 = vmatprep.subr.mxu0 0.0
    %74 = vmatpush1.xpose.msra.mxu0 0.0
    %75 = vmatprep.subr.mxu0 0.0
    %76 = vmatpush1.xpose.msra.mxu0 0.0
    %77 = vmatprep.subr.mxu0 0.0
    %78 = vmatpush1.xpose.msra.mxu0 0.0
    %79 = vmatprep.subr.mxu0 0.0
    %80 = vmatpush1.xpose.msra.mxu0 0.0
    %81 = vmatprep.subr.mxu0 0.0
    %82 = vmatpush1.xpose.msra.mxu0 %v51
    %83 = vmatprep.subr.mxu0 0.0
    %84 = vmatpush1.xpose.msra.mxu0 %v48
    %85 = vmatprep.subr.mxu0 0.0
    %86 = vmatpush2.xpose.msra.mxu0 0.0
    %87 = vmatprep.subr.mxu0 0.0
    %88 = vmatpush2.xpose.msra.mxu0 0.0
    %89 = vmatprep.subr.mxu0 0.0
    %90 = vmatpush2.xpose.msra.mxu0 0.0
    %91 = vmatprep.subr.mxu0 0.0
    %92 = vmatpush2.xpose.msra.mxu0 0.0
    %93 = vmatprep.subr.mxu0 0.0
    %94 = vmatpush2.xpose.msra.mxu0 0.0
    %95 = vmatprep.subr.mxu0 0.0
    %96 = vmatpush2.xpose.msra.mxu0 0.0
    %97 = vmatprep.subr.mxu0 0.0
    %98 = vmatpush2.xpose.msra.mxu0 0.0
    %99 = vmatprep.subr.mxu0 0.0
    %100 = vmatpush2.xpose.msra.mxu0 0.0
    %101 = vmatprep.subr.mxu0 0.0
    %102 = vmatpush2.xpose.msra.mxu0 0.0
    %103 = vmatprep.subr.mxu0 0.0
    %104 = vmatpush2.xpose.msra.mxu0 0.0
    %105 = vmatprep.subr.mxu0 0.0
    %106 = vmatpush2.xpose.msra.mxu0 0.0
    %107 = vmatprep.subr.mxu0 0.0
    %108 = vmatpush2.xpose.msra.mxu0 0.0
    %109 = vmatprep.subr.mxu0 0.0
    %110 = vmatpush2.xpose.msra.mxu0 0.0
    %111 = vmatprep.subr.mxu0 0.0
    %112 = vmatpush2.xpose.msra.mxu0 0.0
    %113 = vmatprep.subr.mxu0 0.0
    %114 = vmatpush2.xpose.msra.mxu0 0.0
    %115 = vmatprep.subr.mxu0 0.0
    %116 = vmatpush2.xpose.msra.mxu0 0.0
    %117 = vmatprep.mubr.f32.mxu0 0.0
    %118 = vmatmul.mubr.f32.gmra.mxu0 %v42
    %v119 = vpop.f32.mrf.mxu0
    %v120 = vadd.f32 0.0, %v119
    %v121 = vpop.f32.mrf.mxu0
    %122 = vmatprep.mubr.f32.mxu0 0.0
    %123 = vmatmul.mubr.f32.gmra.mxu0 %v45
    %v124 = vpop.f32.mrf.mxu0
    %v125 = vadd.f32 0.0, %v124
    %v126 = vpop.f32.mrf.mxu0
    %127 = vdwg.mxu0
    %v128 = vmul.f32 %v120, 2.0
    %v129 = vmul.f32 %v125, 2.0
    %131 = vset.pattern.permute.xlu0 0
    %132 = vperm.xlu0 %131, %v38
    %v133 = vpop.permute.xlu0 %132
    %136 = vset.pattern.permute.xlu0 0
    %137 = vperm.xlu0 %136, %v39
    %v138 = vpop.permute.xlu0 %137
    %v140 = vsub.f32 %v133, %v128
    %v141 = vsub.f32 %v138, %v129
    %v142 = vlaneseq
    %v143 = vshrl.u32 %v142, 7
    %v144 = vadd.s32 %v143, 8
    %vm145 = vcmask 130048
    %v146 = vsel %vm145, %v140, inf
    %v147 = vsel %vm145, %v141, inf
    %v148 = vmin.f32 %v146, %v147
    %v149 = vrot.slane %v148, 4
    %v150 = vmin.f32 %v148, %v149
    %v151 = vrot.slane %v150, 2
    %v152 = vmin.f32 %v150, %v151
    %v153 = vrot.slane %v152, 1
    %v154 = vmin.f32 %v152, %v153
    %vm155 = vcmp.le.f32.partialorder %v140, %v154
    %vm156 = vcmp.le.f32.partialorder %v141, %v154
    %v157 = vcvt.s32.f32 %v143
    %v158 = vcvt.s32.f32 %v144
    %v159 = vsel %vm155, %v157, 16.0
    %v160 = vsel %vm156, %v158, 16.0
    %v161 = vsel %vm145, %v159, inf
    %v162 = vsel %vm145, %v160, inf
    %v163 = vmin.f32 %v161, %v162
    %v164 = vrot.slane %v163, 4
    %v165 = vmin.f32 %v163, %v164
    %v166 = vrot.slane %v165, 2
    %v167 = vmin.f32 %v165, %v166
    %v168 = vrot.slane %v167, 1
    %v169 = vmin.f32 %v167, %v168
    %v170 = vcvt.f32.s32.to.zero.pseudo %v169
    %vm171 = vcmp.eq.s32.totalorder %v143, %v170
    %vm172 = vcmp.eq.s32.totalorder %v144, %v170
    %v173 = vsel %vm171, 1, 0
    %v174 = vsel %vm172, 1, 0
    %v175 = vcvt.s32.f32 %v173
    %v176 = vcvt.s32.f32 %v174
    %177 = vxpose.xlu0.b32.start [1/16] %v175, 128
    %178 = vxpose.xlu0.b32.cont [2/16] %v176, 128
    %179 = vxpose.xlu0.b32.cont [3/16] 0.0, 128
    %180 = vxpose.xlu0.b32.cont [4/16] 0.0, 128
    %181 = vxpose.xlu0.b32.cont [5/16] 0.0, 128
    %182 = vxpose.xlu0.b32.cont [6/16] 0.0, 128
    %183 = vxpose.xlu0.b32.cont [7/16] 0.0, 128
    %184 = vxpose.xlu0.b32.cont [8/16] 0.0, 128
    %185 = vxpose.xlu0.b32.cont [9/16] 0.0, 128
    %186 = vxpose.xlu0.b32.cont [10/16] 0.0, 128
    %187 = vxpose.xlu0.b32.cont [11/16] 0.0, 128
    %188 = vxpose.xlu0.b32.cont [12/16] 0.0, 128
    %189 = vxpose.xlu0.b32.cont [13/16] 0.0, 128
    %190 = vxpose.xlu0.b32.cont [14/16] 0.0, 128
    %191 = vxpose.xlu0.b32.cont [15/16] 0.0, 128
    %192 = vxpose.xlu0.b32.end [16/16] 0.0, 128
    %v193 = vpop.trf.xlu0
    %v194 = vpop.trf.xlu0
    %v195 = vpop.trf.xlu0
    %v196 = vpop.trf.xlu0
    %v197 = vpop.trf.xlu0
    %v198 = vpop.trf.xlu0
    %v199 = vpop.trf.xlu0
    %v200 = vpop.trf.xlu0
    %v201 = vpop.trf.xlu0
    %v202 = vpop.trf.xlu0
    %v203 = vpop.trf.xlu0
    %v204 = vpop.trf.xlu0
    %v205 = vpop.trf.xlu0
    %v206 = vpop.trf.xlu0
    %v207 = vpop.trf.xlu0
    %v208 = vpop.trf.xlu0
    %v210 = vsel %vm145, %v193, 0
    %v213 = vsel %vm145, %v194, 0
    %215 = vmatprep.subr.mxu0 0.0
    %216 = vmatpush1.msra.mxu0 0.0
    %217 = vmatprep.subr.mxu0 0.0
    %218 = vmatpush1.msra.mxu0 0.0
    %219 = vmatprep.subr.mxu0 0.0
    %220 = vmatpush1.msra.mxu0 0.0
    %221 = vmatprep.subr.mxu0 0.0
    %222 = vmatpush1.msra.mxu0 0.0
    %223 = vmatprep.subr.mxu0 0.0
    %224 = vmatpush1.msra.mxu0 0.0
    %225 = vmatprep.subr.mxu0 0.0
    %226 = vmatpush1.msra.mxu0 0.0
    %227 = vmatprep.subr.mxu0 0.0
    %228 = vmatpush1.msra.mxu0 0.0
    %229 = vmatprep.subr.mxu0 0.0
    %230 = vmatpush1.msra.mxu0 0.0
    %231 = vmatprep.subr.mxu0 0.0
    %232 = vmatpush1.msra.mxu0 0.0
    %233 = vmatprep.subr.mxu0 0.0
    %234 = vmatpush1.msra.mxu0 0.0
    %235 = vmatprep.subr.mxu0 0.0
    %236 = vmatpush1.msra.mxu0 0.0
    %237 = vmatprep.subr.mxu0 0.0
    %238 = vmatpush1.msra.mxu0 0.0
    %239 = vmatprep.subr.mxu0 0.0
    %240 = vmatpush1.msra.mxu0 0.0
    %241 = vmatprep.subr.mxu0 0.0
    %242 = vmatpush1.msra.mxu0 0.0
    %243 = vmatprep.subr.mxu0 0.0
    %244 = vmatpush1.msra.mxu0 %v37
    %245 = vmatprep.subr.mxu0 0.0
    %246 = vmatpush1.msra.mxu0 %v36
    %247 = vmatprep.subr.mxu0 0.0
    %248 = vmatpush2.msra.mxu0 0.0
    %249 = vmatprep.subr.mxu0 0.0
    %250 = vmatpush2.msra.mxu0 0.0
    %251 = vmatprep.subr.mxu0 0.0
    %252 = vmatpush2.msra.mxu0 0.0
    %253 = vmatprep.subr.mxu0 0.0
    %254 = vmatpush2.msra.mxu0 0.0
    %255 = vmatprep.subr.mxu0 0.0
    %256 = vmatpush2.msra.mxu0 0.0
    %257 = vmatprep.subr.mxu0 0.0
    %258 = vmatpush2.msra.mxu0 0.0
    %259 = vmatprep.subr.mxu0 0.0
    %260 = vmatpush2.msra.mxu0 0.0
    %261 = vmatprep.subr.mxu0 0.0
    %262 = vmatpush2.msra.mxu0 0.0
    %263 = vmatprep.subr.mxu0 0.0
    %264 = vmatpush2.msra.mxu0 0.0
    %265 = vmatprep.subr.mxu0 0.0
    %266 = vmatpush2.msra.mxu0 0.0
    %267 = vmatprep.subr.mxu0 0.0
    %268 = vmatpush2.msra.mxu0 0.0
    %269 = vmatprep.subr.mxu0 0.0
    %270 = vmatpush2.msra.mxu0 0.0
    %271 = vmatprep.subr.mxu0 0.0
    %272 = vmatpush2.msra.mxu0 0.0
    %273 = vmatprep.subr.mxu0 0.0
    %274 = vmatpush2.msra.mxu0 0.0
    %275 = vmatprep.subr.mxu0 0.0
    %276 = vmatpush2.msra.mxu0 0.0
    %277 = vmatprep.subr.mxu0 0.0
    %278 = vmatpush2.msra.mxu0 0.0
    %279 = vmatprep.mubr.f32.mxu0 0.0
    %280 = vmatmul.mubr.f32.gmra.mxu0 %v210
    %v281 = vpop.f32.mrf.mxu0
    %v282 = vadd.f32 0.0, %v281
    %v283 = vpop.f32.mrf.mxu0
    %284 = vmatprep.mubr.f32.mxu0 0.0
    %285 = vmatmul.mubr.f32.gmra.mxu0 %v213
    %v286 = vpop.f32.mrf.mxu0
    %v287 = vadd.f32 0.0, %v286
    %v288 = vpop.f32.mrf.mxu0
    %289 = vdwg.mxu0
    %290 = vst.msk [vmem:[#allocation6] sm:$0xff] %vm40, %v282
    %291 = vst.msk [vmem:[#allocation6 + $0x8] sm:$0xff] %vm40, %v287
    %vm292 = vcmask 122880
    %293 = vst.msk [vmem:[#allocation7] sm:$0x1] %vm292, %v170
    %s294 = smul.u32 0, 16
    %v295 = vstv %s294
    %v296 = vadd.s32 %v295, %v143
    %v297 = vadd.s32 %v295, %v144
    %vm298 = vcmp.lt.s32.totalorder %v296, 16
    %vm299 = vcmp.lt.s32.totalorder %v297, 16
    %v300 = vsub.f32 %v282, %v34
    %v301 = vsub.f32 %v287, %v35
    %v302 = vsel %vm298, 1, 0
    %v303 = vsel %vm299, 1, 0
    %vm304 = vcmp.eq.s32.totalorder %v302, 1
    %vm305 = vcmp.eq.s32.totalorder %v303, 1
    %v306 = vsel %vm304, %v300, 0.0
    %v307 = vsel %vm305, %v301, 0.0
    %v308 = vmul.f32 %v306, %v306
    %v309 = vmul.f32 %v307, %v307
    %v310 = vsel %vm40, %v308, 0.0
    %v311 = vsel %vm40, %v309, 0.0
    %v312 = vadd.f32 %v310, %v311
    %313 = vadd.xlane.f32.xlu0 %v312
    %v314 = vpop.xlane.xlu0 %313
    %v315 = vrot.slane %v314, 4
    %v316 = vadd.f32 %v314, %v315
    %v317 = vrot.slane %v316, 2
    %v318 = vadd.f32 %v316, %v317
    %v319 = vrot.slane %v318, 1
    %v320 = vadd.f32 %v318, %v319
    %s321 = vtos %v320
    %s322 = scalar_lea.smem [#allocation9], 0
    %323 = sst [smem:[%s322]] %s321
    // Predicated region
    $region18: #{tpu_custom_call.1} parent=1 // pred_check
      _
    $region19: #{tpu_custom_call.1} parent=1 // pred_check_branch
      %325 = sbr.rel (0) target = $region21
    $region20: #{tpu_custom_call.1} parent=1 // pred_region
      %s327 = ssub.s32 256, 256
      %328 = vsyncadd [#allocation4], %s327
      %s329 = sshll.u32 [#allocation6], 4
      %s330 = int_to_ptr.vmem [resolvable:$true] %s329
      %335 = dma.vmem_to_hbm [thread:$0]  %s330, 256, %s3, [#allocation4], 128, 128, 8
    $region21: #{tpu_custom_call.1} parent=1 // pred_fallthru
      _
    // Predicated region
    $region22: #{tpu_custom_call.1} parent=1 // pred_check
      _
    $region23: #{tpu_custom_call.1} parent=1 // pred_check_branch
      %337 = sbr.rel (0) target = $region25
    $region24: #{tpu_custom_call.1} parent=1 // pred_region
      %s339 = ssub.s32 16, 16
      %340 = vsyncadd [#allocation8], %s339
      %s342 = sshll.u32 [#allocation7], 4
      %s343 = int_to_ptr.vmem [resolvable:$true] %s342
      %345 = dma.vmem_to_hbm [thread:$0]  %s343, 16, %s4, [#allocation8]
    $region25: #{tpu_custom_call.1} parent=1 // pred_fallthru
      _
    // Predicated region
    $region26: #{tpu_custom_call.1} parent=1 // pred_check
      _
    $region27: #{tpu_custom_call.1} parent=1 // pred_check_branch
      %347 = sbr.rel (0) target = $region29
    $region28: #{tpu_custom_call.1} parent=1 // pred_region
      %s349 = ssub.s32 16, 16
      %350 = vsyncadd [#allocation5], %s349
      %353 = dma.smem_to_hbm [#allocation9], 16, %s5, [#allocation5]
    $region29: #{tpu_custom_call.1} parent=1 // pred_fallthru
      _
    // Predicated region
    $region30: #{tpu_custom_call.1} parent=1 // pred_check
      _
    $region31: #{tpu_custom_call.1} parent=1 // pred_check_branch
      %355 = sbr.rel (0) target = $region33
    $region32: #{tpu_custom_call.1} parent=1 // pred_region
      %356 = dma.done [#allocation4], 256
    $region33: #{tpu_custom_call.1} parent=1 // pred_fallthru
      _
    // Predicated region
    $region34: #{tpu_custom_call.1} parent=1 // pred_check
      _
    $region35: #{tpu_custom_call.1} parent=1 // pred_check_branch
      %358 = sbr.rel (0) target = $region37
    $region36: #{tpu_custom_call.1} parent=1 // pred_region
      %359 = dma.done [#allocation8], 16
    $region37: #{tpu_custom_call.1} parent=1 // pred_fallthru
      _
    // Predicated region
    $region38: #{tpu_custom_call.1} parent=1 // pred_check
      _
    $region39: #{tpu_custom_call.1} parent=1 // pred_check_branch
      %361 = sbr.rel (0) target = $region41
    $region40: #{tpu_custom_call.1} parent=1 // pred_region
      %362 = dma.done [#allocation5], 16
    $region41: #{tpu_custom_call.1} parent=1 // pred_fallthru
      _
    %363 = sfence
    %364 = vsyncpa [#allocation3], 1
    %365 = vsyncpa [#allocation4], 1
    %366 = vsyncpa [#allocation8], 1
    %367 = vsyncpa [#allocation5], 1

</llo_original>
